<compile_context>
chip_gen: v7x
topology: tpu7x:2x2x1
jax: 0.10.0
libtpu: 0.0.40
codegen_flags: <defaults>
</compile_context>

<pallas_src>
import functools

import jax
import jax.numpy as jnp
import numpy as np
from jax.experimental import pallas as pl
from jax.experimental.pallas import tpu as pltpu


def _encoder_kernel(wT_ref, pT_ref, b_ref, o_ref):
    # wT_ref: (Cout, K)        bf16 weight-normalized conv weights, K = Cin*KH*KW
    # pT_ref: (K, m_block)     bf16 im2col patch columns (batch dim squeezed)
    # b_ref : (Cout, 1)        f32 bias
    # o_ref : (Cout, m_block)  lane-dense output block
    acc = jnp.dot(wT_ref[...], pT_ref[...], preferred_element_type=jnp.float32)
    acc = acc + b_ref[...]                      # (Cout, m) + (Cout, 1) lane-broadcast
    o_ref[...] = jnp.maximum(acc, 0.0).astype(o_ref.dtype)


def _round_up(x, m):
    return ((x + m - 1) // m) * m


def encoder_block(x_nchw, v, g, bias, *, stride, padding,
                  out_dtype=jnp.float32, m_block_cap=4096):
    """Forward pass of EncoderBlock: ReLU(weight_norm_conv2d_circular(x))."""
    Cout, Cin, KH, KW = v.shape
    N, _, H, W = x_nchw.shape

    # ---- weight_norm (dim=0, per output channel): w = g * v / ||v||, in f32 ----
    v32 = v.astype(jnp.float32)
    norm = jnp.sqrt(jnp.sum(v32 * v32, axis=(1, 2, 3), keepdims=True))
    w = g.astype(jnp.float32).reshape(Cout, 1, 1, 1) * v32 / norm    # (Cout,Cin,KH,KW)
    K = Cin * KH * KW
    wT = w.reshape(Cout, K).astype(jnp.bfloat16)   # K ordered (cin, kh, kw)

    # ---- circular padding + im2col, laid out as (N, K, Ho*Wo): no transposes ----
    # TODO(synk): at large H/W, fuse the circular pad + im2col into the kernel by
    # keeping x in HBM (memory_space=pl.ANY) and DMAing row strips / wrap strips
    # with make_async_copy, instead of materializing the 9x-inflated patch tensor.
    xp = jnp.pad(x_nchw, ((0, 0), (0, 0), (padding, padding), (padding, padding)),
                 mode="wrap")                                        # (N,Cin,Hp,Wp)
    Hp, Wp = H + 2 * padding, W + 2 * padding
    H_out = (Hp - KH) // stride + 1
    W_out = (Wp - KW) // stride + 1
    Mo = H_out * W_out

    taps = []
    for kh in range(KH):
        for kw in range(KW):
            taps.append(jax.lax.slice(
                xp, (0, 0, kh, kw),
                (N, Cin, kh + (H_out - 1) * stride + 1,
                 kw + (W_out - 1) * stride + 1),
                (1, 1, stride, stride)))                             # (N,Cin,Ho,Wo)
    pT = jnp.stack(taps, axis=2)                                     # (N,Cin,KH*KW,Ho,Wo)
    pT = pT.reshape(N, K, Mo).astype(jnp.bfloat16)                   # free reshape

    # ---- lane-dense M: pad Ho*Wo up to a multiple of 128 (and of m_block) ----
    m_block = min(_round_up(Mo, 128), m_block_cap)
    Mo_pad = _round_up(Mo, m_block)
    if Mo_pad != Mo:
        pT = jnp.pad(pT, ((0, 0), (0, 0), (0, Mo_pad - Mo)))

    b = bias.reshape(Cout, 1).astype(jnp.float32)

    grid = (N, Mo_pad // m_block)
    cost = pl.CostEstimate(
        flops=2 * N * Mo_pad * K * Cout,
        transcendentals=0,
        bytes_accessed=(pT.size * pT.dtype.itemsize
                        + wT.size * wT.dtype.itemsize
                        + b.size * 4
                        + N * Cout * Mo_pad * jnp.dtype(out_dtype).itemsize))

    out3d = pl.pallas_call(
        _encoder_kernel,
        out_shape=jax.ShapeDtypeStruct((N, Cout, Mo_pad), out_dtype),
        grid=grid,
        in_specs=[
            pl.BlockSpec((Cout, K), lambda n, m: (0, 0)),
            pl.BlockSpec((None, K, m_block), lambda n, m: (n, 0, m)),
            pl.BlockSpec((Cout, 1), lambda n, m: (0, 0)),
        ],
        out_specs=pl.BlockSpec((None, Cout, m_block), lambda n, m: (n, 0, m)),
        compiler_params=pltpu.CompilerParams(
            dimension_semantics=("parallel", "parallel"),
            vmem_limit_bytes=32 * 1024 * 1024),
        cost_estimate=cost,
    )(wT, pT, b)

    if Mo_pad != Mo:
        out3d = out3d[:, :, :Mo]
    # (N, Cout, Ho*Wo) -> (N, Cout, Ho, Wo): free reshape, NO transpose
    return out3d.reshape(N, Cout, H_out, W_out)


def _reference(x_nchw, v, g, bias, *, stride, padding):
    """Plain-JAX f32 reference matching PyTorch semantics."""
    Cout = v.shape[0]
    norm = jnp.sqrt(jnp.sum(v.astype(jnp.float32) ** 2,
                            axis=(1, 2, 3), keepdims=True))
    w = (g.reshape(Cout, 1, 1, 1) * v.astype(jnp.float32)) / norm
    xp = jnp.pad(x_nchw, ((0, 0), (0, 0),
                          (padding, padding), (padding, padding)), mode="wrap")
    y = jax.lax.conv_general_dilated(
        xp.astype(jnp.float32), w,
        window_strides=(stride, stride), padding="VALID",
        dimension_numbers=("NCHW", "OIHW", "NCHW"))
    y = y + bias.reshape(1, Cout, 1, 1)
    return jnp.maximum(y, 0.0)


if __name__ == "__main__":
    # EncoderBlock(input_channels=4, hidden_channels=32,
    #              input_kernel_size=3, input_stride=1, input_padding=1)
    N, Cin, H, W = 2, 4, 16, 16
    Cout, Ksz, stride, padding = 32, 3, 1, 1

    key = jax.random.PRNGKey(0)
    kx, kv, kg = jax.random.split(key, 3)
    x = jax.random.normal(kx, (N, Cin, H, W), dtype=jnp.float32)
    # weight_norm parametrization: v (direction) and g (magnitude); bias is zeros
    v = jax.random.normal(kv, (Cout, Cin, Ksz, Ksz), dtype=jnp.float32) * 0.1
    g = jax.random.uniform(kg, (Cout,), dtype=jnp.float32, minval=0.5, maxval=1.5)
    bias = jnp.zeros((Cout,), dtype=jnp.float32)   # nn.init.zeros_(self.conv.bias)

    fwd = jax.jit(functools.partial(encoder_block, stride=stride, padding=padding))
    out = jax.block_until_ready(fwd(x, v, g, bias))

    ref = _reference(x, v, g, bias, stride=stride, padding=padding)
    assert out.shape == (N, Cout, H, W), out.shape
    # bf16 matmul operands (f32 accumulation) -> relaxed tolerance vs f32 reference.
    np.testing.assert_allclose(np.asarray(out), np.asarray(ref),
                               rtol=2e-2, atol=2e-2)
    print("KERNEL_OK")
</pallas_src>

<mosaic_0001>
module attributes {stable_mosaic.version = 11 : i64} {
  func.func @_encoder_kernel(%arg0: i32, %arg1: i32, %arg2: memref<32x36xbf16, #tpu.memory_space<vmem>>, %arg3: memref<1x36x256xbf16, #tpu.memory_space<vmem>>, %arg4: memref<32x1xf32, #tpu.memory_space<vmem>>, %arg5: memref<1x32x256xf32, #tpu.memory_space<vmem>>) attributes {dimension_semantics = [#tpu.dimension_semantics<parallel>, #tpu.dimension_semantics<parallel>], iteration_bounds = array<i64: 2, 1>, scalar_prefetch = 0 : i64, scratch_operands = 0 : i64, tpu.core_type = #tpu.core_type<tc>, window_params = [{pipeline_mode = #tpu.pipeline_mode<synchronous>, transform_indices = @transform_0, window_bounds = array<i64: 32, 36>}, {transform_indices = @transform_1, window_bounds = array<i64: 1, 36, 256>}, {pipeline_mode = #tpu.pipeline_mode<synchronous>, transform_indices = @transform_2, window_bounds = array<i64: 32, 1>}, {transform_indices = @transform_3, window_bounds = array<i64: 1, 32, 256>}]} {
    %c0 = arith.constant 0 : index
    %c0_0 = arith.constant 0 : index
    %0 = vector.load %arg2[%c0, %c0_0] : memref<32x36xbf16, #tpu.memory_space<vmem>>, vector<32x36xbf16>
    %c0_1 = arith.constant 0 : index
    %c0_2 = arith.constant 0 : index
    %c0_3 = arith.constant 0 : index
    %1 = vector.load %arg3[%c0_1, %c0_2, %c0_3] : memref<1x36x256xbf16, #tpu.memory_space<vmem>>, vector<1x36x256xbf16>
    %2 = vector.shape_cast %1 : vector<1x36x256xbf16> to vector<36x256xbf16>
    %cst = arith.constant dense<0.000000e+00> : vector<32x256xf32>
    %3 = tpu.matmul %0, %2, %cst {dimension_numbers = #tpu.dot_dimension_numbers<[1], [0], [0], [1], [0, 0, 1, 1], [], []>} : vector<32x36xbf16>, vector<36x256xbf16>, vector<32x256xf32> -> vector<32x256xf32>
    %c0_4 = arith.constant 0 : index
    %c0_5 = arith.constant 0 : index
    %4 = vector.load %arg4[%c0_4, %c0_5] : memref<32x1xf32, #tpu.memory_space<vmem>>, vector<32x1xf32>
    %5 = vector.broadcast %4 : vector<32x1xf32> to vector<32x256xf32>
    %6 = arith.addf %3, %5 : vector<32x256xf32>
    %cst_6 = arith.constant 0.000000e+00 : f32
    %7 = vector.broadcast %cst_6 : f32 to vector<32x256xf32>
    %8 = arith.maximumf %6, %7 : vector<32x256xf32>
    %c0_7 = arith.constant 0 : index
    %c0_8 = arith.constant 0 : index
    %c0_9 = arith.constant 0 : index
    %9 = vector.load %arg5[%c0_7, %c0_8, %c0_9] : memref<1x32x256xf32, #tpu.memory_space<vmem>>, vector<1x32x256xf32>
    %10 = vector.shape_cast %9 : vector<1x32x256xf32> to vector<32x256xf32>
    %11 = vector.shape_cast %8 : vector<32x256xf32> to vector<1x32x256xf32>
    tpu.vector_store %arg5[%c0_7, %c0_8, %c0_9], %11 {strides = array<i32>} : memref<1x32x256xf32, #tpu.memory_space<vmem>>, vector<1x32x256xf32>,
    return
  }
  func.func @transform_0(%arg0: i32, %arg1: i32) -> (i32, i32) {
    %c0_i32 = arith.constant 0 : i32
    %c0_i32_0 = arith.constant 0 : i32
    %c0_i32_1 = arith.constant 0 : i32
    return %c0_i32, %c0_i32_0 : i32, i32
  }
  func.func @transform_1(%arg0: i32, %arg1: i32) -> (i32, i32, i32) {
    %c0_i32 = arith.constant 0 : i32
    %c0_i32_0 = arith.constant 0 : i32
    return %arg0, %c0_i32, %arg1 : i32, i32, i32
  }
  func.func @transform_2(%arg0: i32, %arg1: i32) -> (i32, i32) {
    %c0_i32 = arith.constant 0 : i32
    %c0_i32_0 = arith.constant 0 : i32
    %c0_i32_1 = arith.constant 0 : i32
    return %c0_i32, %c0_i32_0 : i32, i32
  }
  func.func @transform_3(%arg0: i32, %arg1: i32) -> (i32, i32, i32) {
    %c0_i32 = arith.constant 0 : i32
    %c0_i32_0 = arith.constant 0 : i32
    return %arg0, %c0_i32, %arg1 : i32, i32, i32
  }
}

</mosaic_0001>

<llo_original>
// kernel: encoder_block.1
$region0: #{encoder_block.1}
  #allocation0 [shape = 'u32[]', space=smem, size = 0x4, offset = 0x4, fixed_abs, tag = 'smem constant byte address 0x4 - core index']
  #allocation1 [shape = 'u32[144,128]{1,0:T(1,128)}', space=vmem, size = 0x12000, scoped, tag = 'internal scratch']
  %s0 = inlined_call_operand.vmem [shape: bf16[32,36], index: 0, kind: input, shape index: {}]
  %s1 = inlined_call_operand.vmem [shape: bf16[2,36,256], index: 1, kind: input, shape index: {}]
  %s2 = inlined_call_operand.vmem [shape: f32[32,1], index: 2, kind: input, shape index: {}]
  %s3 = inlined_call_operand.vmem [shape: f32[2,32,256], index: 3, kind: output, shape index: {}]
  %s4 = sld [smem:[#allocation0]]
  $region45: #{encoder_block.1} parent=0
    _
  %s6 = ssub.s32 1, %s4
  %s7 = scalar_select 0, %s6, %s4
  loop: start=0, step=1, limit=4
  $region2: #{encoder_block.1} parent=0 // loop_pre_header
    _
  $region3: #{encoder_block.1} parent=0 // loop_header
    %s9 = sphi 0, %s13
    %p10 = scmp.ge.s32.totalorder %s9, 4
    %s16 = sphi 0, %s28
    %s17 = sphi 0, %s24
    %s18 = sphi 0, %s16
    %s19 = sphi 0, %s17
    %s20 = sphi 0, %s18
    %s21 = sphi 0, %s19
    %s29 = sphi 0, %s29
    %s31 = sphi 0, %s29
    %s32 = sphi 0, %s31
    %s46 = sphi 0, %s32
    %s54 = sphi 0, %s56
    %s57 = sphi 0, %s54
    %s58 = sphi 0, %s57
    %s74 = sphi 0, %s58
    %s78 = sphi 0, %s78
    %s80 = sphi 0, %s78
    %s81 = sphi 0, %s80
    %s95 = sphi 0, %s81
    %s103 = sphi 0, %s105
    %s106 = sphi 0, %s103
    %s107 = sphi 0, %s106
    %s123 = sphi 0, %s107
  $region4: #{encoder_block.1} parent=0 // loop_header_branch
    %12 = sbr.rel (%p10) target = $region8
  $region5: #{encoder_block.1} parent=0 // loop_body
    %s14 = ssub.s32 %s9, 1
    %s15 = ssub.s32 %s9, 2
    %s22 = sadd.s32 1, %s17
    %p23 = scmp.ge.s32.totalorder %s22, 1
    %s24 = scalar_select %p23, 0, %s22
    %s25 = sadd.s32 1, %s16
    %s26 = scalar_select %p23, %s25, %s16
    %p27 = scmp.ge.s32.totalorder %s26, 2
    %s28 = scalar_select %p27, 0, %s26
    %s30 = sadd.s32 %s29, 1
    %p33 = scmp.eq.s32.totalorder %s9, 1
    %p34 = scmp.ne.s32.totalorder %s29, %s31
    %p35 = scmp.eq.s32.totalorder %s9, 0
    %p36 = por %p34, %p35
    %p37 = scmp.ne.s32.totalorder %s29, %s31
    %p38 = scmp.eq.s32.totalorder %s14, 1
    %p39 = por %p37, %p38
    %p40 = scmp.ne.s32.totalorder %s31, %s32
    %p41 = scmp.eq.s32.totalorder %s14, 0
    %p42 = por %p40, %p41
    %p43 = scmp.ne.s32.totalorder %s31, %s32
    %p44 = scmp.eq.s32.totalorder %s15, 1
    %p45 = por %p43, %p44
    %p47 = scmp.ne.s32.totalorder %s32, %s46
    %p48 = scmp.eq.s32.totalorder %s15, 0
    %p49 = por %p47, %p48
    %s50 = ssub.s32 %s16, %s28
    %s51 = ssub.s32 %s17, %s24
    %s52 = sor.u32 %s50, %s51
    %p53 = scmp.eq.s32.totalorder %s52, 0
    %s55 = sadd.s32 %s54, 1
    %s56 = scalar_select %p53, %s54, %s55
    %p59 = pneg %p53
    %p60 = scmp.eq.s32.totalorder %s9, 1
    %p61 = por %p59, %p60
    %p62 = scmp.ne.s32.totalorder %s54, %s57
    %p63 = scmp.eq.s32.totalorder %s9, 0
    %p64 = por %p62, %p63
    %p65 = scmp.ne.s32.totalorder %s54, %s57
    %p66 = scmp.eq.s32.totalorder %s14, 1
    %p67 = por %p65, %p66
    %p68 = scmp.ne.s32.totalorder %s57, %s58
    %p69 = scmp.eq.s32.totalorder %s14, 0
    %p70 = por %p68, %p69
    %p71 = scmp.ne.s32.totalorder %s57, %s58
    %p72 = scmp.eq.s32.totalorder %s15, 1
    %p73 = por %p71, %p72
    %p75 = scmp.ne.s32.totalorder %s58, %s74
    %p76 = scmp.eq.s32.totalorder %s15, 0
    %p77 = por %p75, %p76
    %s79 = sadd.s32 %s78, 1
    %p82 = scmp.eq.s32.totalorder %s9, 1
    %p83 = scmp.ne.s32.totalorder %s78, %s80
    %p84 = scmp.eq.s32.totalorder %s9, 0
    %p85 = por %p83, %p84
    %p86 = scmp.ne.s32.totalorder %s78, %s80
    %p87 = scmp.eq.s32.totalorder %s14, 1
    %p88 = por %p86, %p87
    %p89 = scmp.ne.s32.totalorder %s80, %s81
    %p90 = scmp.eq.s32.totalorder %s14, 0
    %p91 = por %p89, %p90
    %p92 = scmp.ne.s32.totalorder %s80, %s81
    %p93 = scmp.eq.s32.totalorder %s15, 1
    %p94 = por %p92, %p93
    %p96 = scmp.ne.s32.totalorder %s81, %s95
    %p97 = scmp.eq.s32.totalorder %s15, 0
    %p98 = por %p96, %p97
    %s99 = ssub.s32 %s16, %s28
    %s100 = ssub.s32 %s17, %s24
    %s101 = sor.u32 %s99, %s100
    %p102 = scmp.eq.s32.totalorder %s101, 0
    %s104 = sadd.s32 %s103, 1
    %s105 = scalar_select %p102, %s103, %s104
    %p108 = pneg %p102
    %p109 = scmp.eq.s32.totalorder %s9, 1
    %p110 = por %p108, %p109
    %p111 = scmp.ne.s32.totalorder %s103, %s106
    %p112 = scmp.eq.s32.totalorder %s9, 0
    %p113 = por %p111, %p112
    %p114 = scmp.ne.s32.totalorder %s103, %s106
    %p115 = scmp.eq.s32.totalorder %s14, 1
    %p116 = por %p114, %p115
    %p117 = scmp.ne.s32.totalorder %s106, %s107
    %p118 = scmp.eq.s32.totalorder %s14, 0
    %p119 = por %p117, %p118
    %p120 = scmp.ne.s32.totalorder %s106, %s107
    %p121 = scmp.eq.s32.totalorder %s15, 1
    %p122 = por %p120, %p121
    %p124 = scmp.ne.s32.totalorder %s107, %s123
    %p125 = scmp.eq.s32.totalorder %s15, 0
    %p126 = por %p124, %p125
    %p127 = scmp.le.s32.totalorder 1, %s9
    %p128 = scmp.lt.s32.totalorder %s9, 3
    %p129 = pnand %p127, %p128
    %p130 = pneg %p129
    // Predicated region
    $region9: #{encoder_block.1} parent=5 // pred_check
      _
    $region10: #{encoder_block.1} parent=5 // pred_check_branch
      %132 = sbr.rel (%p129) target = $region12
    $region11: #{encoder_block.1} parent=5 // pred_region
      %s133 = ssub.s32 %s9, 1
      // Predicated region
      $region13: #{encoder_block.1} parent=11 // pred_check
        %p134 = pneg %p42
      $region14: #{encoder_block.1} parent=11 // pred_check_branch
        %136 = sbr.rel (%p134) target = $region16
      $region15: #{encoder_block.1} parent=11 // pred_region
        _
      $region16: #{encoder_block.1} parent=11 // pred_fallthru
        _
      // Predicated region
      $region17: #{encoder_block.1} parent=11 // pred_check
        %p137 = pneg %p91
      $region18: #{encoder_block.1} parent=11 // pred_check_branch
        %139 = sbr.rel (%p137) target = $region20
      $region19: #{encoder_block.1} parent=11 // pred_region
        _
      $region20: #{encoder_block.1} parent=11 // pred_fallthru
        _
    $region12: #{encoder_block.1} parent=5 // pred_fallthru
      _
    %p140 = scmp.lt.s32.totalorder %s9, 2
    // Predicated region
    $region21: #{encoder_block.1} parent=5 // pred_check
      %p141 = pneg %p140
    $region22: #{encoder_block.1} parent=5 // pred_check_branch
      %143 = sbr.rel (%p141) target = $region24
    $region23: #{encoder_block.1} parent=5 // pred_region
      // Predicated region
      $region25: #{encoder_block.1} parent=23 // pred_check
        %p144 = pneg %p64
      $region26: #{encoder_block.1} parent=23 // pred_check_branch
        %146 = sbr.rel (%p144) target = $region28
      $region27: #{encoder_block.1} parent=23 // pred_region
        %s147 = smul.u32 2, %s17
        %p148 = scmp.lt.s32.totalorder %s16, 1
        %s149 = scalar_select %p148, %s16, 1
        %p150 = scmp.lt.s32.totalorder %s147, 1
        %s151 = scalar_select %p150, %s147, 1
        %s152 = smul.addr %s149, 10
        %s153 = sadd.s32 %s151, %s152
        %s154 = smul.addr %s153, 4
        %s155 = scalar_lea.vmem %s1, %s154
        %s156 = smul.u32 2, %s17
      $region28: #{encoder_block.1} parent=23 // pred_fallthru
        _
    $region24: #{encoder_block.1} parent=5 // pred_fallthru
      _
    %p157 = scmp.le.s32.totalorder 1, %s9
    %p158 = scmp.lt.s32.totalorder %s9, 3
    %p159 = pnand %p157, %p158
    %p160 = pneg %p159
    // Predicated region
    $region29: #{encoder_block.1} parent=5 // pred_check
      _
    $region30: #{encoder_block.1} parent=5 // pred_check_branch
      %162 = sbr.rel (%p159) target = $region32
    $region31: #{encoder_block.1} parent=5 // pred_region
      %s163 = ssub.s32 %s9, 1
      %p164 = pneg %p42
      %p165 = pneg %p39
      %s166 = smul.u32 2, %s19
      %p167 = scmp.lt.s32.totalorder %s18, 1
      %s168 = scalar_select %p167, %s18, 1
      %p169 = scmp.lt.s32.totalorder %s166, 1
      %s170 = scalar_select %p169, %s166, 1
      %s171 = smul.addr %s168, 10
      %s172 = sadd.s32 %s170, %s171
      %s173 = smul.addr %s172, 4
      %s174 = scalar_lea.vmem %s1, %s173
      %p175 = pneg %p70
      %p176 = pneg %p67
      %p177 = pneg %p91
      %p178 = pneg %p88
      %p179 = pneg %p119
      %p180 = pneg %p116
      %s181 = smul.u32 2, %s19
      %p182 = scmp.lt.s32.totalorder %s18, 1
      %s183 = scalar_select %p182, %s18, 1
      %p184 = scmp.lt.s32.totalorder %s181, 1
      %s185 = scalar_select %p184, %s181, 1
      %s186 = smul.addr %s183, 8
      %s187 = sadd.s32 %s185, %s186
      %s188 = smul.addr %s187, 8
      %s189 = scalar_lea.vmem %s3, %s188
      %s190 = smul.u32 2, %s19
      %p191 = scmp.lt.s32.totalorder %s18, 1
      %s192 = scalar_select %p191, %s18, 1
      %p193 = scmp.lt.s32.totalorder %s190, 1
      %s194 = scalar_select %p193, %s190, 1
      %s195 = smul.addr %s192, 10
      %s196 = sadd.s32 %s194, %s195
      %s197 = smul.addr %s196, 4
      %s198 = scalar_lea.vmem %s1, %s197
      %s199 = smul.u32 2, %s19
      %s200 = smul.u32 2, %s19
      %p201 = scmp.lt.s32.totalorder %s18, 1
      %s202 = scalar_select %p201, %s18, 1
      %p203 = scmp.lt.s32.totalorder %s200, 1
      %s204 = scalar_select %p203, %s200, 1
      %s205 = smul.addr %s202, 8
      %s206 = sadd.s32 %s204, %s205
      %s207 = smul.addr %s206, 8
      %s208 = scalar_lea.vmem %s3, %s207
      %s209 = smul.u32 2, %s19
      %v211 = vld [vmem:[%s0] sm:$0xf]
      %v212 = vld [vmem:[%s0 + $0x4] sm:$0xf]
      %v213 = vld [vmem:[%s0 + $0x8] sm:$0xf]
      %v214 = vld [vmem:[%s0 + $0xc] sm:$0xf]
      %v215 = vld [vmem:[%s198] sm:$0xff]
      %v216 = vld [vmem:[%s198 + $0x8] sm:$0xff]
      %v217 = vld [vmem:[%s198 + $0x10] sm:$0xff]
      %v218 = vld [vmem:[%s198 + $0x18] sm:$0xff]
      %v219 = vld [vmem:[%s198 + $0x20] sm:$0x33]
      %v220 = vld [vmem:[%s2] sm:$0xff]
      %v221 = vld [vmem:[%s2 + $0x8] sm:$0xff]
      %v222 = vld [vmem:[%s2 + $0x10] sm:$0xff]
      %v223 = vld [vmem:[%s2 + $0x18] sm:$0xff]
      %225 = vset.pattern.permute.xlu0 0
      %226 = vperm.xlu0 %225, %v220
      %v227 = vpop.permute.xlu0 %226
      %230 = vset.pattern.permute.xlu0 0
      %231 = vperm.xlu0 %230, %v221
      %v232 = vpop.permute.xlu0 %231
      %235 = vset.pattern.permute.xlu0 0
      %236 = vperm.xlu0 %235, %v222
      %v237 = vpop.permute.xlu0 %236
      %240 = vset.pattern.permute.xlu0 0
      %241 = vperm.xlu0 %240, %v223
      %v242 = vpop.permute.xlu0 %241
      %v248 = vunpack.c.l.b16 %v211
      %v249 = vunpack.c.l.b16 %v212
      %v250 = vunpack.c.l.b16 %v213
      %v251 = vunpack.c.l.b16 %v214
      %v252 = vpack.c.b16 %v249, %v248
      %v253 = vpack.c.b16 %v251, %v250
      %v259 = vunpack.c.l.b16 %v215
      %v260 = vunpack.c.h.b16 %v215
      %v261 = vunpack.c.l.b16 %v216
      %v262 = vunpack.c.h.b16 %v216
      %v263 = vunpack.c.l.b16 %v217
      %v264 = vunpack.c.h.b16 %v217
      %v265 = vunpack.c.l.b16 %v218
      %v266 = vunpack.c.h.b16 %v218
      %v267 = vunpack.c.l.b16 %v219
      %v268 = vunpack.c.h.b16 %v219
      %v269 = vpack.c.b16 %v261, %v259
      %v270 = vpack.c.b16 %v262, %v260
      %v271 = vpack.c.b16 %v265, %v263
      %v272 = vpack.c.b16 %v266, %v264
      %v273 = vpack.c.b16 %v267, %v267
      %v274 = vpack.c.b16 %v268, %v268
      %vm279 = vcmask 293888
      %v281 = vsel %vm279, %v252, 0
      %v284 = vsel %vm279, %v253, 0
      %vm286 = vcmask 1041408
      %v288 = vsel %vm286, %v273, 0
      %v291 = vsel %vm286, %v274, 0
      %293 = vmatprep.subr.bf16.mxu0 %v270
      %294 = vmatpush1.bf16.msra.mxu0 %v269
      %295 = vmatprep.subr.bf16.mxu0 %v272
      %296 = vmatpush1.bf16.msra.mxu0 %v271
      %297 = vmatprep.subr.bf16.mxu0 %v291
      %298 = vmatpush1.bf16.msra.mxu0 %v288
      %299 = vmatprep.subr.bf16.mxu0 0
      %300 = vmatpush1.bf16.msra.mxu0 0
      %301 = vmatprep.subr.bf16.mxu0 0
      %302 = vmatpush1.bf16.msra.mxu0 0
      %303 = vmatprep.subr.bf16.mxu0 0
      %304 = vmatpush1.bf16.msra.mxu0 0
      %305 = vmatprep.subr.bf16.mxu0 0
      %306 = vmatpush1.bf16.msra.mxu0 0
      %307 = vmatprep.subr.bf16.mxu0 0
      %308 = vmatpush1.bf16.msra.mxu0 0
      %309 = vmatprep.subr.bf16.mxu0 0
      %310 = vmatpush1.bf16.msra.mxu0 0
      %311 = vmatprep.subr.bf16.mxu0 0
      %312 = vmatpush1.bf16.msra.mxu0 0
      %313 = vmatprep.subr.bf16.mxu0 0
      %314 = vmatpush1.bf16.msra.mxu0 0
      %315 = vmatprep.subr.bf16.mxu0 0
      %316 = vmatpush1.bf16.msra.mxu0 0
      %317 = vmatprep.subr.bf16.mxu0 0
      %318 = vmatpush1.bf16.msra.mxu0 0
      %319 = vmatprep.subr.bf16.mxu0 0
      %320 = vmatpush1.bf16.msra.mxu0 0
      %321 = vmatprep.subr.bf16.mxu0 0
      %322 = vmatpush1.bf16.msra.mxu0 0
      %323 = vmatprep.subr.bf16.mxu0 0
      %324 = vmatpush1.bf16.msra.mxu0 0
      %325 = vmatprep.mubr.bf16.mxu0 0
      %326 = vmatmul.mubr.bf16.gmra.mrb[0].mxu0 %v281
      %v327 = vpop.f32.mrb[0].mxu0
      %v328 = vadd.f32 %v227, %v327
      %v329 = vpop.f32.mrb[0].mxu0
      %v330 = vadd.f32 %v227, %v329
      %v331 = vpop.f32.mrb[0].mxu0
      %v332 = vadd.f32 %v232, %v331
      %v333 = vpop.f32.mrb[0].mxu0
      %v334 = vadd.f32 %v232, %v333
      %335 = vmatprep.mubr.bf16.mxu0 0
      %336 = vmatmul.mubr.bf16.gmra.mrb[0].mxu0 %v284
      %v337 = vpop.f32.mrb[0].mxu0
      %v338 = vadd.f32 %v237, %v337
      %v339 = vpop.f32.mrb[0].mxu0
      %v340 = vadd.f32 %v237, %v339
      %v341 = vpop.f32.mrb[0].mxu0
      %v342 = vadd.f32 %v242, %v341
      %v343 = vpop.f32.mrb[0].mxu0
      %v344 = vadd.f32 %v242, %v343
      %345 = vdwg.mxu0
      %v346 = vmax.f32 %v328, 0.0
      %v347 = vmax.f32 %v330, 0.0
      %v348 = vmax.f32 %v332, 0.0
      %v349 = vmax.f32 %v334, 0.0
      %v350 = vmax.f32 %v338, 0.0
      %v351 = vmax.f32 %v340, 0.0
      %v352 = vmax.f32 %v342, 0.0
      %v353 = vmax.f32 %v344, 0.0
      %354 = vst [vmem:[%s208] sm:$0xff] %v346
      %355 = vst [vmem:[%s208 + $0x8] sm:$0xff] %v347
      %356 = vst [vmem:[%s208 + $0x10] sm:$0xff] %v348
      %357 = vst [vmem:[%s208 + $0x18] sm:$0xff] %v349
      %358 = vst [vmem:[%s208 + $0x20] sm:$0xff] %v350
      %359 = vst [vmem:[%s208 + $0x28] sm:$0xff] %v351
      %360 = vst [vmem:[%s208 + $0x30] sm:$0xff] %v352
      %361 = vst [vmem:[%s208 + $0x38] sm:$0xff] %v353
      %s362 = smul.u32 2, %s19
      %p363 = scmp.lt.s32.totalorder %s18, 1
      %s364 = scalar_select %p363, %s18, 1
      %p365 = scmp.lt.s32.totalorder %s362, 1
      %s366 = scalar_select %p365, %s362, 1
      %s367 = smul.addr %s364, 8
      %s368 = sadd.s32 %s366, %s367
      %s369 = smul.addr %s368, 8
      %s370 = scalar_lea.vmem %s3, %s369
      // Predicated region
      $region33: #{encoder_block.1} parent=31 // pred_check
        %p371 = pneg %p116
      $region34: #{encoder_block.1} parent=31 // pred_check_branch
        %373 = sbr.rel (%p371) target = $region36
      $region35: #{encoder_block.1} parent=31 // pred_region
        %s374 = smul.u32 2, %s19
      $region36: #{encoder_block.1} parent=31 // pred_fallthru
        _
    $region32: #{encoder_block.1} parent=5 // pred_fallthru
      _
    %p375 = scmp.le.s32.totalorder 2, %s9
    // Predicated region
    $region37: #{encoder_block.1} parent=5 // pred_check
      %p376 = pneg %p375
    $region38: #{encoder_block.1} parent=5 // pred_check_branch
      %378 = sbr.rel (%p376) target = $region40
    $region39: #{encoder_block.1} parent=5 // pred_region
      %s379 = ssub.s32 %s9, 2
      // Predicated region
      $region41: #{encoder_block.1} parent=39 // pred_check
        %p380 = pneg %p122
      $region42: #{encoder_block.1} parent=39 // pred_check_branch
        %382 = sbr.rel (%p380) target = $region44
      $region43: #{encoder_block.1} parent=39 // pred_region
        %s383 = smul.u32 2, %s21
        %p384 = scmp.lt.s32.totalorder %s20, 1
        %s385 = scalar_select %p384, %s20, 1
        %p386 = scmp.lt.s32.totalorder %s383, 1
        %s387 = scalar_select %p386, %s383, 1
        %s388 = smul.addr %s385, 8
        %s389 = sadd.s32 %s387, %s388
        %s390 = smul.addr %s389, 8
        %s391 = scalar_lea.vmem %s3, %s390
      $region44: #{encoder_block.1} parent=39 // pred_fallthru
        _
    $region40: #{encoder_block.1} parent=5 // pred_fallthru
      _
  $region6: #{encoder_block.1} parent=0 // loop_footer
    %s13 = sadd.s32 1, %s9
  $region7: #{encoder_block.1} parent=0 // loop_footer_branch
    %8 = sbr.rel target = $region3
  $region8: #{encoder_block.1} parent=0 // loop_exit
    _

</llo_original>
